<compile_context>
chip_gen: v7x
topology: tpu7x:2x2x1
jax: 0.10.0
libtpu: 0.0.40
codegen_flags: <defaults>
</compile_context>

<pallas_src>
import functools

import jax
import jax.numpy as jnp
from jax.experimental import pallas as pl
from jax.experimental.pallas import tpu as pltpu

F_PAD = 16           # packed feature rows (14 real + 2 zero pad)
HIDDEN = 32          # MLP hidden width
OUT_DIM = 3          # RGB
DEFAULT_TILE = 8192  # points (lane axis) per grid step; see per-chip note above


def _round_up(x, m):
    return ((x + m - 1) // m) * m


def reflection_field_kernel(x_ref, w1t_ref, wdt_ref, w2t_ref, b2t_ref, o_ref):
    x = x_ref[...]                                    # (F_PAD, TILE), lane-dense
    d = x[3:6, :]                                     # view directions (3, TILE)
    n = x[6:9, :]                                     # surface normals (3, TILE)

    # Reflect view directions about normals: refl = d - 2 (d.n) n
    # We only need the correction term  delta = refl - d = -2 (d.n) n  because
    # the fused first-layer matmul already includes Wd^T @ d.
    d_dot_n = jnp.sum(d * n, axis=0, keepdims=True)   # (1, TILE)
    delta = (-2.0 * d_dot_n) * n                      # (3, TILE)

    # First layer (bias b1 folded in via the constant-1 feature row of x):
    #   h = W1^T @ [pos; dir; nrm; alb; rough; 1; 0; 0]  +  Wd^T @ (refl - dir)
    h = (jnp.dot(w1t_ref[...], x, preferred_element_type=jnp.float32) +
         jnp.dot(wdt_ref[...], delta, preferred_element_type=jnp.float32))
    h = jnp.maximum(h, 0.0)                           # ReLU, (HIDDEN, TILE)

    out = jnp.dot(w2t_ref[...], h, preferred_element_type=jnp.float32) + b2t_ref[...]
    o_ref[...] = jax.nn.sigmoid(out)                  # (OUT_DIM, TILE), lane-dense store


@functools.partial(jax.jit, static_argnames=("tile",))
def _reflection_field_impl(positions, directions, normals, albedo, roughness,
                           params, *, tile):
    n_pts = positions.shape[0]
    n_pad = _round_up(n_pts, tile)
    wp, wd, wn, wa, wr, b1, w2, b2 = params

    # --- wrapper-side layout plumbing (done once by XLA, outside the kernel) ---
    # Fused, pre-transposed first-layer weight with b1 folded in (row 13).
    w1 = jnp.concatenate(
        [wp, wd, wn, wa, wr, b1, jnp.zeros((F_PAD - 14, HIDDEN), jnp.float32)],
        axis=0)                                       # (F_PAD, HIDDEN)
    w1t = jnp.asarray(w1.T, jnp.float32)              # (HIDDEN, F_PAD)
    wdt = jnp.asarray(wd.T, jnp.float32)              # (HIDDEN, 3)
    w2t = jnp.asarray(w2.T, jnp.float32)              # (OUT_DIM, HIDDEN)
    b2t = jnp.asarray(b2.T, jnp.float32)              # (OUT_DIM, 1)

    ones = jnp.ones((n_pts, 1), jnp.float32)
    zpad = jnp.zeros((n_pts, F_PAD - 14), jnp.float32)
    feats = jnp.concatenate(
        [positions, directions, normals, albedo, roughness, ones, zpad],
        axis=1).astype(jnp.float32)                   # (n_pts, F_PAD)
    x = jnp.pad(feats.T, ((0, 0), (0, n_pad - n_pts)))  # (F_PAD, n_pad), lane-dense

    def _full(shape):
        return pl.BlockSpec(shape, lambda i: (0, 0))

    grid_spec = pltpu.PrefetchScalarGridSpec(
        num_scalar_prefetch=0,
        grid=(n_pad // tile,),
        in_specs=[
            pl.BlockSpec((F_PAD, tile), lambda i: (0, i)),   # packed point slab
            _full(w1t.shape), _full(wdt.shape),
            _full(w2t.shape), _full(b2t.shape),
        ],
        out_specs=pl.BlockSpec((OUT_DIM, tile), lambda i: (0, i)),
    )

    out_t = pl.pallas_call(
        reflection_field_kernel,
        out_shape=jax.ShapeDtypeStruct((OUT_DIM, n_pad), jnp.float32),
        grid_spec=grid_spec,
        compiler_params=pltpu.CompilerParams(
            dimension_semantics=("parallel",)),
    )(x, w1t, wdt, w2t, b2t)                          # (OUT_DIM, n_pad)

    return out_t[:, :n_pts].T                         # (n_pts, OUT_DIM)


def reflection_field(positions, directions, normals, albedo, roughness, params,
                     tile=None):
    """RGB radiance for each point; handles arbitrary point counts via padding."""
    n_pts = positions.shape[0]
    if tile is None:
        # Small inputs: keep padding modest; large inputs: big tile for roofline.
        tile = min(DEFAULT_TILE, max(512, _round_up(n_pts, 512)))
    return _reflection_field_impl(positions, directions, normals, albedo,
                                  roughness, params, tile=tile)


def reflection_field_ref(positions, directions, normals, albedo, roughness, params):
    """Pure-JAX reference for correctness checking."""
    wp, wd, wn, wa, wr, b1, w2, b2 = params
    d_dot_n = jnp.sum(directions * normals, axis=-1, keepdims=True)
    refl = directions - 2.0 * d_dot_n * normals
    h = (positions @ wp + refl @ wd + normals @ wn + albedo @ wa
         + roughness * wr + b1)
    h = jnp.maximum(h, 0.0)
    return jax.nn.sigmoid(h @ w2 + b2)


def init_params(key):
    ks = jax.random.split(key, 8)
    scale = 0.5
    wp = scale * jax.random.normal(ks[0], (3, HIDDEN), jnp.float32)
    wd = scale * jax.random.normal(ks[1], (3, HIDDEN), jnp.float32)
    wn = scale * jax.random.normal(ks[2], (3, HIDDEN), jnp.float32)
    wa = scale * jax.random.normal(ks[3], (3, HIDDEN), jnp.float32)
    wr = scale * jax.random.normal(ks[4], (1, HIDDEN), jnp.float32)
    b1 = 0.1 * jax.random.normal(ks[5], (1, HIDDEN), jnp.float32)
    w2 = scale * jax.random.normal(ks[6], (HIDDEN, OUT_DIM), jnp.float32)
    b2 = 0.1 * jax.random.normal(ks[7], (1, OUT_DIM), jnp.float32)
    return (wp, wd, wn, wa, wr, b1, w2, b2)


if __name__ == "__main__":
    key = jax.random.PRNGKey(0)
    k_in, k_par = jax.random.split(key)
    kp, kd, kn, ka, kr = jax.random.split(k_in, 5)

    B, P = 2, 128                      # batch=2, 128 points each -> 256 total
    N = B * P

    positions = jax.random.normal(kp, (N, 3), jnp.float32)
    directions = jax.random.normal(kd, (N, 3), jnp.float32)
    directions = directions / jnp.linalg.norm(directions, axis=-1, keepdims=True)
    normals = jax.random.normal(kn, (N, 3), jnp.float32)
    normals = normals / jnp.linalg.norm(normals, axis=-1, keepdims=True)
    albedo = jax.random.uniform(ka, (N, 3), jnp.float32)
    roughness = jax.random.uniform(kr, (N, 1), jnp.float32)

    params = init_params(k_par)

    out = reflection_field(positions, directions, normals, albedo, roughness, params)
    out = jax.block_until_ready(out)

    ref = reflection_field_ref(positions, directions, normals, albedo, roughness, params)
    assert out.shape == (N, OUT_DIM)
    assert jnp.allclose(out, ref, atol=1e-5, rtol=1e-5), "mismatch vs JAX reference"

    # reshape back to (batch, points, rgb) if the caller wants batched output
    _ = out.reshape(B, P, OUT_DIM)

    print("KERNEL_OK")
</pallas_src>

<mosaic_0001>
module attributes {stable_mosaic.version = 11 : i64} {
  func.func @reflection_field_kernel(%arg0: i32, %arg1: memref<16x512xf32, #tpu.memory_space<vmem>>, %arg2: memref<32x16xf32, #tpu.memory_space<vmem>>, %arg3: memref<32x3xf32, #tpu.memory_space<vmem>>, %arg4: memref<3x32xf32, #tpu.memory_space<vmem>>, %arg5: memref<3x1xf32, #tpu.memory_space<vmem>>, %arg6: memref<3x512xf32, #tpu.memory_space<vmem>>) attributes {dimension_semantics = [#tpu.dimension_semantics<parallel>], iteration_bounds = array<i64: 1>, scalar_prefetch = 0 : i64, scratch_operands = 0 : i64, tpu.core_type = #tpu.core_type<tc>, window_params = [{transform_indices = @transform_0, window_bounds = array<i64: 16, 512>}, {pipeline_mode = #tpu.pipeline_mode<synchronous>, transform_indices = @transform_1, window_bounds = array<i64: 32, 16>}, {pipeline_mode = #tpu.pipeline_mode<synchronous>, transform_indices = @transform_2, window_bounds = array<i64: 32, 3>}, {pipeline_mode = #tpu.pipeline_mode<synchronous>, transform_indices = @transform_3, window_bounds = array<i64: 3, 32>}, {pipeline_mode = #tpu.pipeline_mode<synchronous>, transform_indices = @transform_4, window_bounds = array<i64: 3, 1>}, {transform_indices = @transform_5, window_bounds = array<i64: 3, 512>}]} {
    %c0 = arith.constant 0 : index
    %c0_0 = arith.constant 0 : index
    %0 = vector.load %arg1[%c0, %c0_0] : memref<16x512xf32, #tpu.memory_space<vmem>>, vector<16x512xf32>
    %1 = vector.extract_strided_slice %0 {offsets = [3, 0], sizes = [3, 512], strides = [1, 1]} : vector<16x512xf32> to vector<3x512xf32>
    %2 = vector.extract_strided_slice %0 {offsets = [6, 0], sizes = [3, 512], strides = [1, 1]} : vector<16x512xf32> to vector<3x512xf32>
    %3 = arith.mulf %1, %2 : vector<3x512xf32>
    %cst = arith.constant dense<0.000000e+00> : vector<512xf32>
    %4 = vector.multi_reduction <add>, %3, %cst [0] : vector<3x512xf32> to vector<512xf32>
    %5 = vector.shape_cast %4 : vector<512xf32> to vector<1x512xf32>
    %cst_1 = arith.constant -2.000000e+00 : f32
    %6 = vector.broadcast %cst_1 : f32 to vector<1x512xf32>
    %7 = arith.mulf %6, %5 : vector<1x512xf32>
    %8 = vector.broadcast %7 : vector<1x512xf32> to vector<3x512xf32>
    %9 = arith.mulf %8, %2 : vector<3x512xf32>
    %c0_2 = arith.constant 0 : index
    %c0_3 = arith.constant 0 : index
    %10 = vector.load %arg2[%c0_2, %c0_3] : memref<32x16xf32, #tpu.memory_space<vmem>>, vector<32x16xf32>
    %cst_4 = arith.constant dense<0.000000e+00> : vector<32x512xf32>
    %11 = tpu.matmul %10, %0, %cst_4 {dimension_numbers = #tpu.dot_dimension_numbers<[1], [0], [0], [1], [0, 0, 1, 1], [], []>} : vector<32x16xf32>, vector<16x512xf32>, vector<32x512xf32> -> vector<32x512xf32>
    %c0_5 = arith.constant 0 : index
    %c0_6 = arith.constant 0 : index
    %12 = vector.load %arg3[%c0_5, %c0_6] : memref<32x3xf32, #tpu.memory_space<vmem>>, vector<32x3xf32>
    %cst_7 = arith.constant dense<0.000000e+00> : vector<32x512xf32>
    %13 = tpu.matmul %12, %9, %cst_7 {dimension_numbers = #tpu.dot_dimension_numbers<[1], [0], [0], [1], [0, 0, 1, 1], [], []>} : vector<32x3xf32>, vector<3x512xf32>, vector<32x512xf32> -> vector<32x512xf32>
    %14 = arith.addf %11, %13 : vector<32x512xf32>
    %cst_8 = arith.constant 0.000000e+00 : f32
    %15 = vector.broadcast %cst_8 : f32 to vector<32x512xf32>
    %16 = arith.maximumf %14, %15 : vector<32x512xf32>
    %c0_9 = arith.constant 0 : index
    %c0_10 = arith.constant 0 : index
    %17 = vector.load %arg4[%c0_9, %c0_10] : memref<3x32xf32, #tpu.memory_space<vmem>>, vector<3x32xf32>
    %cst_11 = arith.constant dense<0.000000e+00> : vector<3x512xf32>
    %18 = tpu.matmul %17, %16, %cst_11 {dimension_numbers = #tpu.dot_dimension_numbers<[1], [0], [0], [1], [0, 0, 1, 1], [], []>} : vector<3x32xf32>, vector<32x512xf32>, vector<3x512xf32> -> vector<3x512xf32>
    %c0_12 = arith.constant 0 : index
    %c0_13 = arith.constant 0 : index
    %19 = vector.load %arg5[%c0_12, %c0_13] : memref<3x1xf32, #tpu.memory_space<vmem>>, vector<3x1xf32>
    %20 = vector.broadcast %19 : vector<3x1xf32> to vector<3x512xf32>
    %21 = arith.addf %18, %20 : vector<3x512xf32>
    %22 = arith.negf %21 : vector<3x512xf32>
    %23 = math.exp %22 : vector<3x512xf32>
    %cst_14 = arith.constant 1.000000e+00 : f32
    %24 = vector.broadcast %cst_14 : f32 to vector<3x512xf32>
    %25 = arith.addf %24, %23 : vector<3x512xf32>
    %26 = arith.divf %24, %25 : vector<3x512xf32>
    %c0_15 = arith.constant 0 : index
    %c0_16 = arith.constant 0 : index
    %27 = vector.load %arg6[%c0_15, %c0_16] : memref<3x512xf32, #tpu.memory_space<vmem>>, vector<3x512xf32>
    tpu.vector_store %arg6[%c0_15, %c0_16], %26 {strides = array<i32>} : memref<3x512xf32, #tpu.memory_space<vmem>>, vector<3x512xf32>,
    return
  }
  func.func @transform_0(%arg0: i32) -> (i32, i32) {
    %c0_i32 = arith.constant 0 : i32
    %c0_i32_0 = arith.constant 0 : i32
    return %c0_i32, %arg0 : i32, i32
  }
  func.func @transform_1(%arg0: i32) -> (i32, i32) {
    %c0_i32 = arith.constant 0 : i32
    %c0_i32_0 = arith.constant 0 : i32
    %c0_i32_1 = arith.constant 0 : i32
    return %c0_i32, %c0_i32_0 : i32, i32
  }
  func.func @transform_2(%arg0: i32) -> (i32, i32) {
    %c0_i32 = arith.constant 0 : i32
    %c0_i32_0 = arith.constant 0 : i32
    %c0_i32_1 = arith.constant 0 : i32
    return %c0_i32, %c0_i32_0 : i32, i32
  }
  func.func @transform_3(%arg0: i32) -> (i32, i32) {
    %c0_i32 = arith.constant 0 : i32
    %c0_i32_0 = arith.constant 0 : i32
    %c0_i32_1 = arith.constant 0 : i32
    return %c0_i32, %c0_i32_0 : i32, i32
  }
  func.func @transform_4(%arg0: i32) -> (i32, i32) {
    %c0_i32 = arith.constant 0 : i32
    %c0_i32_0 = arith.constant 0 : i32
    %c0_i32_1 = arith.constant 0 : i32
    return %c0_i32, %c0_i32_0 : i32, i32
  }
  func.func @transform_5(%arg0: i32) -> (i32, i32) {
    %c0_i32 = arith.constant 0 : i32
    %c0_i32_0 = arith.constant 0 : i32
    return %c0_i32, %arg0 : i32, i32
  }
}

</mosaic_0001>

<llo_original>
// kernel: _reflection_field_impl.1
$region0: #{_reflection_field_impl.1}
  #allocation0 [shape = 'u32[]', space=smem, size = 0x4, offset = 0x4, fixed_abs, tag = 'smem constant byte address 0x4 - core index']
  #allocation1 [shape = 'u32[144,128]{1,0:T(1,128)}', space=vmem, size = 0x12000, scoped, tag = 'internal scratch']
  %s0 = inlined_call_operand.vmem [shape: f32[16,512], index: 0, kind: input, shape index: {}]
  %s1 = inlined_call_operand.vmem [shape: f32[32,16], index: 1, kind: input, shape index: {}]
  %s2 = inlined_call_operand.vmem [shape: f32[32,3], index: 2, kind: input, shape index: {}]
  %s3 = inlined_call_operand.vmem [shape: f32[3,32], index: 3, kind: input, shape index: {}]
  %s4 = inlined_call_operand.vmem [shape: f32[3,1], index: 4, kind: input, shape index: {}]
  %s5 = inlined_call_operand.vmem [shape: f32[3,512], index: 5, kind: output, shape index: {}]
  %s6 = sld [smem:[#allocation0]]
  $region30: #{_reflection_field_impl.1} parent=0
    _
  %s8 = ssub.s32 1, %s6
  %s9 = scalar_select 0, %s8, %s6
  // Predicated region
  $region2: #{_reflection_field_impl.1} parent=0 // pred_check
    _
  $region3: #{_reflection_field_impl.1} parent=0 // pred_check_branch
    %11 = sbr.rel (0) target = $region5
  $region4: #{_reflection_field_impl.1} parent=0 // pred_region
    _
  $region5: #{_reflection_field_impl.1} parent=0 // pred_fallthru
    _
  // Predicated region
  $region6: #{_reflection_field_impl.1} parent=0 // pred_check
    _
  $region7: #{_reflection_field_impl.1} parent=0 // pred_check_branch
    %13 = sbr.rel (0) target = $region9
  $region8: #{_reflection_field_impl.1} parent=0 // pred_region
    _
  $region9: #{_reflection_field_impl.1} parent=0 // pred_fallthru
    _
  // Predicated region
  $region10: #{_reflection_field_impl.1} parent=0 // pred_check
    _
  $region11: #{_reflection_field_impl.1} parent=0 // pred_check_branch
    %15 = sbr.rel (0) target = $region13
  $region12: #{_reflection_field_impl.1} parent=0 // pred_region
    _
  $region13: #{_reflection_field_impl.1} parent=0 // pred_fallthru
    _
  // Predicated region
  $region14: #{_reflection_field_impl.1} parent=0 // pred_check
    _
  $region15: #{_reflection_field_impl.1} parent=0 // pred_check_branch
    %17 = sbr.rel (0) target = $region17
  $region16: #{_reflection_field_impl.1} parent=0 // pred_region
    _
  $region17: #{_reflection_field_impl.1} parent=0 // pred_fallthru
    _
  // Predicated region
  $region18: #{_reflection_field_impl.1} parent=0 // pred_check
    _
  $region19: #{_reflection_field_impl.1} parent=0 // pred_check_branch
    %19 = sbr.rel (0) target = $region21
  $region20: #{_reflection_field_impl.1} parent=0 // pred_region
    _
  $region21: #{_reflection_field_impl.1} parent=0 // pred_fallthru
    _
  %v20 = vld [vmem:[%s0] sm:$0xff]
  %v21 = vld [vmem:[%s0 + $0x8] sm:$0xff]
  %v22 = vld [vmem:[%s0 + $0x10] sm:$0xff]
  %v23 = vld [vmem:[%s0 + $0x18] sm:$0xff]
  %v24 = vld [vmem:[%s0 + $0x20] sm:$0xff]
  %v25 = vld [vmem:[%s0 + $0x28] sm:$0xff]
  %v26 = vld [vmem:[%s0 + $0x30] sm:$0xff]
  %v27 = vld [vmem:[%s0 + $0x38] sm:$0xff]
  %vm36 = vcmask 1044480
  %v37 = vrot.slane %v20, 3
  %v38 = vrot.slane %v24, 3
  %v39 = vsel %vm36, %v37, %v38
  %v40 = vrot.slane %v21, 3
  %v41 = vrot.slane %v25, 3
  %v42 = vsel %vm36, %v40, %v41
  %v43 = vrot.slane %v22, 3
  %v44 = vrot.slane %v26, 3
  %v45 = vsel %vm36, %v43, %v44
  %v46 = vrot.slane %v23, 3
  %v47 = vrot.slane %v27, 3
  %v48 = vsel %vm36, %v46, %v47
  %v53 = vmul.f32 %v20, %v39
  %v54 = vmul.f32 %v21, %v42
  %v55 = vmul.f32 %v22, %v45
  %v56 = vmul.f32 %v23, %v48
  %v61 = vrot.slane %v53, 3
  %v62 = vrot.slane %v54, 3
  %v63 = vrot.slane %v55, 3
  %v64 = vrot.slane %v56, 3
  %vm69 = vcmask 1042432
  %v70 = vsel %vm69, %v61, 0.0
  %v71 = vrot.slane %v70, 4
  %v72 = vadd.f32 %v70, %v71
  %v73 = vrot.slane %v72, 2
  %v74 = vadd.f32 %v72, %v73
  %v75 = vrot.slane %v74, 1
  %v76 = vadd.f32 %v74, %v75
  %v77 = vsel %vm69, %v62, 0.0
  %v78 = vrot.slane %v77, 4
  %v79 = vadd.f32 %v77, %v78
  %v80 = vrot.slane %v79, 2
  %v81 = vadd.f32 %v79, %v80
  %v82 = vrot.slane %v81, 1
  %v83 = vadd.f32 %v81, %v82
  %v84 = vsel %vm69, %v63, 0.0
  %v85 = vrot.slane %v84, 4
  %v86 = vadd.f32 %v84, %v85
  %v87 = vrot.slane %v86, 2
  %v88 = vadd.f32 %v86, %v87
  %v89 = vrot.slane %v88, 1
  %v90 = vadd.f32 %v88, %v89
  %v91 = vsel %vm69, %v64, 0.0
  %v92 = vrot.slane %v91, 4
  %v93 = vadd.f32 %v91, %v92
  %v94 = vrot.slane %v93, 2
  %v95 = vadd.f32 %v93, %v94
  %v96 = vrot.slane %v95, 1
  %v97 = vadd.f32 %v95, %v96
  %v98 = vmul.f32 %v76, -2.0
  %v99 = vmul.f32 %v83, -2.0
  %v100 = vmul.f32 %v90, -2.0
  %v101 = vmul.f32 %v97, -2.0
  %v102 = vmul.f32 %v98, %v20
  %v103 = vmul.f32 %v99, %v21
  %v104 = vmul.f32 %v100, %v22
  %v105 = vmul.f32 %v101, %v23
  %v106 = vmul.f32 %v98, %v24
  %v107 = vmul.f32 %v99, %v25
  %v108 = vmul.f32 %v100, %v26
  %v109 = vmul.f32 %v101, %v27
  %v110 = vld [vmem:[%s1] sm:$0xff]
  %v111 = vld [vmem:[%s1 + $0x8] sm:$0xff]
  %v112 = vld [vmem:[%s1 + $0x10] sm:$0xff]
  %v113 = vld [vmem:[%s1 + $0x18] sm:$0xff]
  %v114 = vld [vmem:[%s2] sm:$0xff]
  %v115 = vld [vmem:[%s2 + $0x8] sm:$0xff]
  %v116 = vld [vmem:[%s2 + $0x10] sm:$0xff]
  %v117 = vld [vmem:[%s2 + $0x18] sm:$0xff]
  %vm126 = vcmask 1041408
  %v127 = vrot.slane %v102, 6
  %v128 = vrot.slane %v106, 6
  %v129 = vsel %vm126, %v127, %v128
  %v130 = vrot.slane %v103, 6
  %v131 = vrot.slane %v107, 6
  %v132 = vsel %vm126, %v130, %v131
  %v133 = vrot.slane %v104, 6
  %v134 = vrot.slane %v108, 6
  %v135 = vsel %vm126, %v133, %v134
  %v136 = vrot.slane %v105, 6
  %v137 = vrot.slane %v109, 6
  %v138 = vsel %vm126, %v136, %v137
  %vm139 = vcmask 23552
  %v141 = vsel %vm139, %v114, 0
  %v144 = vsel %vm139, %v115, 0
  %v147 = vsel %vm139, %v116, 0
  %v150 = vsel %vm139, %v117, 0
  %v152 = vsel %vm69, %v129, 0
  %v154 = vsel %vm69, %v132, 0
  %v156 = vsel %vm69, %v135, 0
  %v158 = vsel %vm69, %v138, 0
  %160 = vmatprep.subr.mxu0 %v154
  %161 = vmatpush1.msra.mxu0 %v152
  %162 = vmatprep.subr.mxu0 0.0
  %163 = vmatpush1.msra.mxu0 0.0
  %164 = vmatprep.subr.mxu0 0.0
  %165 = vmatpush1.msra.mxu0 0.0
  %166 = vmatprep.subr.mxu0 0.0
  %167 = vmatpush1.msra.mxu0 0.0
  %168 = vmatprep.subr.mxu0 0.0
  %169 = vmatpush1.msra.mxu0 0.0
  %170 = vmatprep.subr.mxu0 0.0
  %171 = vmatpush1.msra.mxu0 0.0
  %172 = vmatprep.subr.mxu0 0.0
  %173 = vmatpush1.msra.mxu0 0.0
  %174 = vmatprep.subr.mxu0 0.0
  %175 = vmatpush1.msra.mxu0 0.0
  %176 = vmatprep.subr.mxu0 0.0
  %177 = vmatpush1.msra.mxu0 0.0
  %178 = vmatprep.subr.mxu0 0.0
  %179 = vmatpush1.msra.mxu0 0.0
  %180 = vmatprep.subr.mxu0 0.0
  %181 = vmatpush1.msra.mxu0 0.0
  %182 = vmatprep.subr.mxu0 0.0
  %183 = vmatpush1.msra.mxu0 0.0
  %184 = vmatprep.subr.mxu0 0.0
  %185 = vmatpush1.msra.mxu0 0.0
  %186 = vmatprep.subr.mxu0 0.0
  %187 = vmatpush1.msra.mxu0 0.0
  %188 = vmatprep.subr.mxu0 0.0
  %189 = vmatpush1.msra.mxu0 0.0
  %190 = vmatprep.subr.mxu0 0.0
  %191 = vmatpush1.msra.mxu0 0.0
  %192 = vmatprep.subr.mxu0 0.0
  %193 = vmatpush1.msra.mxu0 0.0
  %194 = vmatprep.subr.mxu0 0.0
  %195 = vmatpush1.msra.mxu0 0.0
  %196 = vmatprep.subr.mxu0 0.0
  %197 = vmatpush1.msra.mxu0 0.0
  %198 = vmatprep.subr.mxu0 0.0
  %199 = vmatpush1.msra.mxu0 0.0
  %200 = vmatprep.subr.mxu0 0.0
  %201 = vmatpush1.msra.mxu0 0.0
  %202 = vmatprep.subr.mxu0 0.0
  %203 = vmatpush1.msra.mxu0 0.0
  %204 = vmatprep.subr.mxu0 0.0
  %205 = vmatpush1.msra.mxu0 0.0
  %206 = vmatprep.subr.mxu0 0.0
  %207 = vmatpush1.msra.mxu0 0.0
  %208 = vmatprep.subr.mxu0 0.0
  %209 = vmatpush1.msra.mxu0 0.0
  %210 = vmatprep.subr.mxu0 0.0
  %211 = vmatpush1.msra.mxu0 0.0
  %212 = vmatprep.subr.mxu0 0.0
  %213 = vmatpush1.msra.mxu0 0.0
  %214 = vmatprep.subr.mxu0 0.0
  %215 = vmatpush1.msra.mxu0 0.0
  %216 = vmatprep.subr.mxu0 0.0
  %217 = vmatpush1.msra.mxu0 0.0
  %218 = vmatprep.subr.mxu0 0.0
  %219 = vmatpush1.msra.mxu0 0.0
  %220 = vmatprep.subr.mxu0 0.0
  %221 = vmatpush1.msra.mxu0 0.0
  %222 = vmatprep.subr.mxu0 0.0
  %223 = vmatpush1.msra.mxu0 0.0
  %224 = vmatprep.mubr.f32.mxu0 0.0
  %225 = vmatmul.mubr.f32.gmra.mrb[0].mxu0 %v141
  %v226 = vpop.f32.mrb[0].mxu0
  %v227 = vadd.f32 0.0, %v226
  %v228 = vpop.f32.mrb[0].mxu0
  %v229 = vadd.f32 0.0, %v228
  %230 = vmatprep.mubr.f32.mxu0 0.0
  %231 = vmatmul.mubr.f32.gmra.mrb[0].mxu0 %v144
  %v232 = vpop.f32.mrb[0].mxu0
  %v233 = vadd.f32 0.0, %v232
  %v234 = vpop.f32.mrb[0].mxu0
  %v235 = vadd.f32 0.0, %v234
  %236 = vmatprep.mubr.f32.mxu0 0.0
  %237 = vmatmul.mubr.f32.gmra.mrb[0].mxu0 %v147
  %v238 = vpop.f32.mrb[0].mxu0
  %v239 = vadd.f32 0.0, %v238
  %v240 = vpop.f32.mrb[0].mxu0
  %v241 = vadd.f32 0.0, %v240
  %242 = vmatprep.mubr.f32.mxu0 0.0
  %243 = vmatmul.mubr.f32.gmra.mrb[0].mxu0 %v150
  %v244 = vpop.f32.mrb[0].mxu0
  %v245 = vadd.f32 0.0, %v244
  %v246 = vpop.f32.mrb[0].mxu0
  %v247 = vadd.f32 0.0, %v246
  %248 = vdwg.mxu0
  %249 = vmatprep.subr.mxu0 %v158
  %250 = vmatpush1.msra.mxu0 %v156
  %251 = vmatprep.subr.mxu0 0.0
  %252 = vmatpush1.msra.mxu0 0.0
  %253 = vmatprep.subr.mxu0 0.0
  %254 = vmatpush1.msra.mxu0 0.0
  %255 = vmatprep.subr.mxu0 0.0
  %256 = vmatpush1.msra.mxu0 0.0
  %257 = vmatprep.subr.mxu0 0.0
  %258 = vmatpush1.msra.mxu0 0.0
  %259 = vmatprep.subr.mxu0 0.0
  %260 = vmatpush1.msra.mxu0 0.0
  %261 = vmatprep.subr.mxu0 0.0
  %262 = vmatpush1.msra.mxu0 0.0
  %263 = vmatprep.subr.mxu0 0.0
  %264 = vmatpush1.msra.mxu0 0.0
  %265 = vmatprep.subr.mxu0 0.0
  %266 = vmatpush1.msra.mxu0 0.0
  %267 = vmatprep.subr.mxu0 0.0
  %268 = vmatpush1.msra.mxu0 0.0
  %269 = vmatprep.subr.mxu0 0.0
  %270 = vmatpush1.msra.mxu0 0.0
  %271 = vmatprep.subr.mxu0 0.0
  %272 = vmatpush1.msra.mxu0 0.0
  %273 = vmatprep.subr.mxu0 0.0
  %274 = vmatpush1.msra.mxu0 0.0
  %275 = vmatprep.subr.mxu0 0.0
  %276 = vmatpush1.msra.mxu0 0.0
  %277 = vmatprep.subr.mxu0 0.0
  %278 = vmatpush1.msra.mxu0 0.0
  %279 = vmatprep.subr.mxu0 0.0
  %280 = vmatpush1.msra.mxu0 0.0
  %281 = vmatprep.subr.mxu0 0.0
  %282 = vmatpush1.msra.mxu0 0.0
  %283 = vmatprep.subr.mxu0 0.0
  %284 = vmatpush1.msra.mxu0 0.0
  %285 = vmatprep.subr.mxu0 0.0
  %286 = vmatpush1.msra.mxu0 0.0
  %287 = vmatprep.subr.mxu0 0.0
  %288 = vmatpush1.msra.mxu0 0.0
  %289 = vmatprep.subr.mxu0 0.0
  %290 = vmatpush1.msra.mxu0 0.0
  %291 = vmatprep.subr.mxu0 0.0
  %292 = vmatpush1.msra.mxu0 0.0
  %293 = vmatprep.subr.mxu0 0.0
  %294 = vmatpush1.msra.mxu0 0.0
  %295 = vmatprep.subr.mxu0 0.0
  %296 = vmatpush1.msra.mxu0 0.0
  %297 = vmatprep.subr.mxu0 0.0
  %298 = vmatpush1.msra.mxu0 0.0
  %299 = vmatprep.subr.mxu0 0.0
  %300 = vmatpush1.msra.mxu0 0.0
  %301 = vmatprep.subr.mxu0 0.0
  %302 = vmatpush1.msra.mxu0 0.0
  %303 = vmatprep.subr.mxu0 0.0
  %304 = vmatpush1.msra.mxu0 0.0
  %305 = vmatprep.subr.mxu0 0.0
  %306 = vmatpush1.msra.mxu0 0.0
  %307 = vmatprep.subr.mxu0 0.0
  %308 = vmatpush1.msra.mxu0 0.0
  %309 = vmatprep.subr.mxu0 0.0
  %310 = vmatpush1.msra.mxu0 0.0
  %311 = vmatprep.subr.mxu0 0.0
  %312 = vmatpush1.msra.mxu0 0.0
  %313 = vmatprep.mubr.f32.mxu0 0.0
  %314 = vmatmul.mubr.f32.gmra.mrb[0].mxu0 %v141
  %v315 = vpop.f32.mrb[0].mxu0
  %v316 = vadd.f32 0.0, %v315
  %v317 = vpop.f32.mrb[0].mxu0
  %v318 = vadd.f32 0.0, %v317
  %319 = vmatprep.mubr.f32.mxu0 0.0
  %320 = vmatmul.mubr.f32.gmra.mrb[0].mxu0 %v144
  %v321 = vpop.f32.mrb[0].mxu0
  %v322 = vadd.f32 0.0, %v321
  %v323 = vpop.f32.mrb[0].mxu0
  %v324 = vadd.f32 0.0, %v323
  %325 = vmatprep.mubr.f32.mxu0 0.0
  %326 = vmatmul.mubr.f32.gmra.mrb[0].mxu0 %v147
  %v327 = vpop.f32.mrb[0].mxu0
  %v328 = vadd.f32 0.0, %v327
  %v329 = vpop.f32.mrb[0].mxu0
  %v330 = vadd.f32 0.0, %v329
  %331 = vmatprep.mubr.f32.mxu0 0.0
  %332 = vmatmul.mubr.f32.gmra.mrb[0].mxu0 %v150
  %v333 = vpop.f32.mrb[0].mxu0
  %v334 = vadd.f32 0.0, %v333
  %v335 = vpop.f32.mrb[0].mxu0
  %v336 = vadd.f32 0.0, %v335
  %337 = vdwg.mxu0
  %vm338 = vcmask 130048
  %v340 = vsel %vm338, %v110, 0
  %v343 = vsel %vm338, %v111, 0
  %v346 = vsel %vm338, %v112, 0
  %v349 = vsel %vm338, %v113, 0
  %351 = vmatprep.subr.mxu0 %v21
  %352 = vmatpush1.msra.mxu0 %v20
  %353 = vmatprep.subr.mxu0 %v25
  %354 = vmatpush1.msra.mxu0 %v24
  %355 = vmatprep.subr.mxu0 0.0
  %356 = vmatpush1.msra.mxu0 0.0
  %357 = vmatprep.subr.mxu0 0.0
  %358 = vmatpush1.msra.mxu0 0.0
  %359 = vmatprep.subr.mxu0 0.0
  %360 = vmatpush1.msra.mxu0 0.0
  %361 = vmatprep.subr.mxu0 0.0
  %362 = vmatpush1.msra.mxu0 0.0
  %363 = vmatprep.subr.mxu0 0.0
  %364 = vmatpush1.msra.mxu0 0.0
  %365 = vmatprep.subr.mxu0 0.0
  %366 = vmatpush1.msra.mxu0 0.0
  %367 = vmatprep.subr.mxu0 0.0
  %368 = vmatpush1.msra.mxu0 0.0
  %369 = vmatprep.subr.mxu0 0.0
  %370 = vmatpush1.msra.mxu0 0.0
  %371 = vmatprep.subr.mxu0 0.0
  %372 = vmatpush1.msra.mxu0 0.0
  %373 = vmatprep.subr.mxu0 0.0
  %374 = vmatpush1.msra.mxu0 0.0
  %375 = vmatprep.subr.mxu0 0.0
  %376 = vmatpush1.msra.mxu0 0.0
  %377 = vmatprep.subr.mxu0 0.0
  %378 = vmatpush1.msra.mxu0 0.0
  %379 = vmatprep.subr.mxu0 0.0
  %380 = vmatpush1.msra.mxu0 0.0
  %381 = vmatprep.subr.mxu0 0.0
  %382 = vmatpush1.msra.mxu0 0.0
  %383 = vmatprep.subr.mxu0 0.0
  %384 = vmatpush1.msra.mxu0 0.0
  %385 = vmatprep.subr.mxu0 0.0
  %386 = vmatpush1.msra.mxu0 0.0
  %387 = vmatprep.subr.mxu0 0.0
  %388 = vmatpush1.msra.mxu0 0.0
  %389 = vmatprep.subr.mxu0 0.0
  %390 = vmatpush1.msra.mxu0 0.0
  %391 = vmatprep.subr.mxu0 0.0
  %392 = vmatpush1.msra.mxu0 0.0
  %393 = vmatprep.subr.mxu0 0.0
  %394 = vmatpush1.msra.mxu0 0.0
  %395 = vmatprep.subr.mxu0 0.0
  %396 = vmatpush1.msra.mxu0 0.0
  %397 = vmatprep.subr.mxu0 0.0
  %398 = vmatpush1.msra.mxu0 0.0
  %399 = vmatprep.subr.mxu0 0.0
  %400 = vmatpush1.msra.mxu0 0.0
  %401 = vmatprep.subr.mxu0 0.0
  %402 = vmatpush1.msra.mxu0 0.0
  %403 = vmatprep.subr.mxu0 0.0
  %404 = vmatpush1.msra.mxu0 0.0
  %405 = vmatprep.subr.mxu0 0.0
  %406 = vmatpush1.msra.mxu0 0.0
  %407 = vmatprep.subr.mxu0 0.0
  %408 = vmatpush1.msra.mxu0 0.0
  %409 = vmatprep.subr.mxu0 0.0
  %410 = vmatpush1.msra.mxu0 0.0
  %411 = vmatprep.subr.mxu0 0.0
  %412 = vmatpush1.msra.mxu0 0.0
  %413 = vmatprep.subr.mxu0 0.0
  %414 = vmatpush1.msra.mxu0 0.0
  %415 = vmatprep.mubr.f32.mxu0 0.0
  %416 = vmatmul.mubr.f32.gmra.mrb[0].mxu0 %v340
  %v417 = vpop.f32.mrb[0].mxu0
  %v418 = vadd.f32 %v227, %v417
  %v419 = vpop.f32.mrb[0].mxu0
  %v420 = vadd.f32 %v229, %v419
  %421 = vmatprep.mubr.f32.mxu0 0.0
  %422 = vmatmul.mubr.f32.gmra.mrb[0].mxu0 %v343
  %v423 = vpop.f32.mrb[0].mxu0
  %v424 = vadd.f32 %v233, %v423
  %v425 = vpop.f32.mrb[0].mxu0
  %v426 = vadd.f32 %v235, %v425
  %427 = vmatprep.mubr.f32.mxu0 0.0
  %428 = vmatmul.mubr.f32.gmra.mrb[0].mxu0 %v346
  %v429 = vpop.f32.mrb[0].mxu0
  %v430 = vadd.f32 %v239, %v429
  %v431 = vpop.f32.mrb[0].mxu0
  %v432 = vadd.f32 %v241, %v431
  %433 = vmatprep.mubr.f32.mxu0 0.0
  %434 = vmatmul.mubr.f32.gmra.mrb[0].mxu0 %v349
  %v435 = vpop.f32.mrb[0].mxu0
  %v436 = vadd.f32 %v245, %v435
  %v437 = vpop.f32.mrb[0].mxu0
  %v438 = vadd.f32 %v247, %v437
  %439 = vdwg.mxu0
  %440 = vmatprep.subr.mxu0 %v23
  %441 = vmatpush1.msra.mxu0 %v22
  %442 = vmatprep.subr.mxu0 %v27
  %443 = vmatpush1.msra.mxu0 %v26
  %444 = vmatprep.subr.mxu0 0.0
  %445 = vmatpush1.msra.mxu0 0.0
  %446 = vmatprep.subr.mxu0 0.0
  %447 = vmatpush1.msra.mxu0 0.0
  %448 = vmatprep.subr.mxu0 0.0
  %449 = vmatpush1.msra.mxu0 0.0
  %450 = vmatprep.subr.mxu0 0.0
  %451 = vmatpush1.msra.mxu0 0.0
  %452 = vmatprep.subr.mxu0 0.0
  %453 = vmatpush1.msra.mxu0 0.0
  %454 = vmatprep.subr.mxu0 0.0
  %455 = vmatpush1.msra.mxu0 0.0
  %456 = vmatprep.subr.mxu0 0.0
  %457 = vmatpush1.msra.mxu0 0.0
  %458 = vmatprep.subr.mxu0 0.0
  %459 = vmatpush1.msra.mxu0 0.0
  %460 = vmatprep.subr.mxu0 0.0
  %461 = vmatpush1.msra.mxu0 0.0
  %462 = vmatprep.subr.mxu0 0.0
  %463 = vmatpush1.msra.mxu0 0.0
  %464 = vmatprep.subr.mxu0 0.0
  %465 = vmatpush1.msra.mxu0 0.0
  %466 = vmatprep.subr.mxu0 0.0
  %467 = vmatpush1.msra.mxu0 0.0
  %468 = vmatprep.subr.mxu0 0.0
  %469 = vmatpush1.msra.mxu0 0.0
  %470 = vmatprep.subr.mxu0 0.0
  %471 = vmatpush1.msra.mxu0 0.0
  %472 = vmatprep.subr.mxu0 0.0
  %473 = vmatpush1.msra.mxu0 0.0
  %474 = vmatprep.subr.mxu0 0.0
  %475 = vmatpush1.msra.mxu0 0.0
  %476 = vmatprep.subr.mxu0 0.0
  %477 = vmatpush1.msra.mxu0 0.0
  %478 = vmatprep.subr.mxu0 0.0
  %479 = vmatpush1.msra.mxu0 0.0
  %480 = vmatprep.subr.mxu0 0.0
  %481 = vmatpush1.msra.mxu0 0.0
  %482 = vmatprep.subr.mxu0 0.0
  %483 = vmatpush1.msra.mxu0 0.0
  %484 = vmatprep.subr.mxu0 0.0
  %485 = vmatpush1.msra.mxu0 0.0
  %486 = vmatprep.subr.mxu0 0.0
  %487 = vmatpush1.msra.mxu0 0.0
  %488 = vmatprep.subr.mxu0 0.0
  %489 = vmatpush1.msra.mxu0 0.0
  %490 = vmatprep.subr.mxu0 0.0
  %491 = vmatpush1.msra.mxu0 0.0
  %492 = vmatprep.subr.mxu0 0.0
  %493 = vmatpush1.msra.mxu0 0.0
  %494 = vmatprep.subr.mxu0 0.0
  %495 = vmatpush1.msra.mxu0 0.0
  %496 = vmatprep.subr.mxu0 0.0
  %497 = vmatpush1.msra.mxu0 0.0
  %498 = vmatprep.subr.mxu0 0.0
  %499 = vmatpush1.msra.mxu0 0.0
  %500 = vmatprep.subr.mxu0 0.0
  %501 = vmatpush1.msra.mxu0 0.0
  %502 = vmatprep.subr.mxu0 0.0
  %503 = vmatpush1.msra.mxu0 0.0
  %504 = vmatprep.mubr.f32.mxu0 0.0
  %505 = vmatmul.mubr.f32.gmra.mrb[0].mxu0 %v340
  %v506 = vpop.f32.mrb[0].mxu0
  %v507 = vadd.f32 %v316, %v506
  %v508 = vpop.f32.mrb[0].mxu0
  %v509 = vadd.f32 %v318, %v508
  %510 = vmatprep.mubr.f32.mxu0 0.0
  %511 = vmatmul.mubr.f32.gmra.mrb[0].mxu0 %v343
  %v512 = vpop.f32.mrb[0].mxu0
  %v513 = vadd.f32 %v322, %v512
  %v514 = vpop.f32.mrb[0].mxu0
  %v515 = vadd.f32 %v324, %v514
  %516 = vmatprep.mubr.f32.mxu0 0.0
  %517 = vmatmul.mubr.f32.gmra.mrb[0].mxu0 %v346
  %v518 = vpop.f32.mrb[0].mxu0
  %v519 = vadd.f32 %v328, %v518
  %v520 = vpop.f32.mrb[0].mxu0
  %v521 = vadd.f32 %v330, %v520
  %522 = vmatprep.mubr.f32.mxu0 0.0
  %523 = vmatmul.mubr.f32.gmra.mrb[0].mxu0 %v349
  %v524 = vpop.f32.mrb[0].mxu0
  %v525 = vadd.f32 %v334, %v524
  %v526 = vpop.f32.mrb[0].mxu0
  %v527 = vadd.f32 %v336, %v526
  %528 = vdwg.mxu0
  %v529 = vmax.f32 %v418, 0.0
  %v530 = vmax.f32 %v420, 0.0
  %v531 = vmax.f32 %v507, 0.0
  %v532 = vmax.f32 %v509, 0.0
  %v533 = vmax.f32 %v424, 0.0
  %v534 = vmax.f32 %v426, 0.0
  %v535 = vmax.f32 %v513, 0.0
  %v536 = vmax.f32 %v515, 0.0
  %v537 = vmax.f32 %v430, 0.0
  %v538 = vmax.f32 %v432, 0.0
  %v539 = vmax.f32 %v519, 0.0
  %v540 = vmax.f32 %v521, 0.0
  %v541 = vmax.f32 %v436, 0.0
  %v542 = vmax.f32 %v438, 0.0
  %v543 = vmax.f32 %v525, 0.0
  %v544 = vmax.f32 %v527, 0.0
  %v545 = vld [vmem:[%s3] sm:$0x7]
  %v546 = vld [vmem:[%s4] sm:$0x7]
  %548 = vset.pattern.permute.xlu0 0
  %549 = vperm.xlu0 %548, %v546
  %v550 = vpop.permute.xlu0 %549
  %vm552 = vcmask 261120
  %v554 = vsel %vm552, %v545, 0
  %556 = vmatprep.subr.mxu0 %v530
  %557 = vmatpush1.msra.mxu0 %v529
  %558 = vmatprep.subr.mxu0 %v534
  %559 = vmatpush1.msra.mxu0 %v533
  %560 = vmatprep.subr.mxu0 %v538
  %561 = vmatpush1.msra.mxu0 %v537
  %562 = vmatprep.subr.mxu0 %v542
  %563 = vmatpush1.msra.mxu0 %v541
  %564 = vmatprep.subr.mxu0 0.0
  %565 = vmatpush1.msra.mxu0 0.0
  %566 = vmatprep.subr.mxu0 0.0
  %567 = vmatpush1.msra.mxu0 0.0
  %568 = vmatprep.subr.mxu0 0.0
  %569 = vmatpush1.msra.mxu0 0.0
  %570 = vmatprep.subr.mxu0 0.0
  %571 = vmatpush1.msra.mxu0 0.0
  %572 = vmatprep.subr.mxu0 0.0
  %573 = vmatpush1.msra.mxu0 0.0
  %574 = vmatprep.subr.mxu0 0.0
  %575 = vmatpush1.msra.mxu0 0.0
  %576 = vmatprep.subr.mxu0 0.0
  %577 = vmatpush1.msra.mxu0 0.0
  %578 = vmatprep.subr.mxu0 0.0
  %579 = vmatpush1.msra.mxu0 0.0
  %580 = vmatprep.subr.mxu0 0.0
  %581 = vmatpush1.msra.mxu0 0.0
  %582 = vmatprep.subr.mxu0 0.0
  %583 = vmatpush1.msra.mxu0 0.0
  %584 = vmatprep.subr.mxu0 0.0
  %585 = vmatpush1.msra.mxu0 0.0
  %586 = vmatprep.subr.mxu0 0.0
  %587 = vmatpush1.msra.mxu0 0.0
  %588 = vmatprep.subr.mxu0 0.0
  %589 = vmatpush1.msra.mxu0 0.0
  %590 = vmatprep.subr.mxu0 0.0
  %591 = vmatpush1.msra.mxu0 0.0
  %592 = vmatprep.subr.mxu0 0.0
  %593 = vmatpush1.msra.mxu0 0.0
  %594 = vmatprep.subr.mxu0 0.0
  %595 = vmatpush1.msra.mxu0 0.0
  %596 = vmatprep.subr.mxu0 0.0
  %597 = vmatpush1.msra.mxu0 0.0
  %598 = vmatprep.subr.mxu0 0.0
  %599 = vmatpush1.msra.mxu0 0.0
  %600 = vmatprep.subr.mxu0 0.0
  %601 = vmatpush1.msra.mxu0 0.0
  %602 = vmatprep.subr.mxu0 0.0
  %603 = vmatpush1.msra.mxu0 0.0
  %604 = vmatprep.subr.mxu0 0.0
  %605 = vmatpush1.msra.mxu0 0.0
  %606 = vmatprep.subr.mxu0 0.0
  %607 = vmatpush1.msra.mxu0 0.0
  %608 = vmatprep.subr.mxu0 0.0
  %609 = vmatpush1.msra.mxu0 0.0
  %610 = vmatprep.subr.mxu0 0.0
  %611 = vmatpush1.msra.mxu0 0.0
  %612 = vmatprep.subr.mxu0 0.0
  %613 = vmatpush1.msra.mxu0 0.0
  %614 = vmatprep.subr.mxu0 0.0
  %615 = vmatpush1.msra.mxu0 0.0
  %616 = vmatprep.subr.mxu0 0.0
  %617 = vmatpush1.msra.mxu0 0.0
  %618 = vmatprep.subr.mxu0 0.0
  %619 = vmatpush1.msra.mxu0 0.0
  %620 = vmatprep.mubr.f32.mxu0 0.0
  %621 = vmatmul.mubr.f32.gmra.mrb[0].mxu0 %v554
  %v622 = vpop.f32.mrb[0].mxu0
  %v623 = vadd.f32 %v550, %v622
  %v624 = vpop.f32.mrb[0].mxu0
  %v625 = vadd.f32 %v550, %v624
  %626 = vdwg.mxu0
  %627 = vmatprep.subr.mxu0 %v532
  %628 = vmatpush1.msra.mxu0 %v531
  %629 = vmatprep.subr.mxu0 %v536
  %630 = vmatpush1.msra.mxu0 %v535
  %631 = vmatprep.subr.mxu0 %v540
  %632 = vmatpush1.msra.mxu0 %v539
  %633 = vmatprep.subr.mxu0 %v544
  %634 = vmatpush1.msra.mxu0 %v543
  %635 = vmatprep.subr.mxu0 0.0
  %636 = vmatpush1.msra.mxu0 0.0
  %637 = vmatprep.subr.mxu0 0.0
  %638 = vmatpush1.msra.mxu0 0.0
  %639 = vmatprep.subr.mxu0 0.0
  %640 = vmatpush1.msra.mxu0 0.0
  %641 = vmatprep.subr.mxu0 0.0
  %642 = vmatpush1.msra.mxu0 0.0
  %643 = vmatprep.subr.mxu0 0.0
  %644 = vmatpush1.msra.mxu0 0.0
  %645 = vmatprep.subr.mxu0 0.0
  %646 = vmatpush1.msra.mxu0 0.0
  %647 = vmatprep.subr.mxu0 0.0
  %648 = vmatpush1.msra.mxu0 0.0
  %649 = vmatprep.subr.mxu0 0.0
  %650 = vmatpush1.msra.mxu0 0.0
  %651 = vmatprep.subr.mxu0 0.0
  %652 = vmatpush1.msra.mxu0 0.0
  %653 = vmatprep.subr.mxu0 0.0
  %654 = vmatpush1.msra.mxu0 0.0
  %655 = vmatprep.subr.mxu0 0.0
  %656 = vmatpush1.msra.mxu0 0.0
  %657 = vmatprep.subr.mxu0 0.0
  %658 = vmatpush1.msra.mxu0 0.0
  %659 = vmatprep.subr.mxu0 0.0
  %660 = vmatpush1.msra.mxu0 0.0
  %661 = vmatprep.subr.mxu0 0.0
  %662 = vmatpush1.msra.mxu0 0.0
  %663 = vmatprep.subr.mxu0 0.0
  %664 = vmatpush1.msra.mxu0 0.0
  %665 = vmatprep.subr.mxu0 0.0
  %666 = vmatpush1.msra.mxu0 0.0
  %667 = vmatprep.subr.mxu0 0.0
  %668 = vmatpush1.msra.mxu0 0.0
  %669 = vmatprep.subr.mxu0 0.0
  %670 = vmatpush1.msra.mxu0 0.0
  %671 = vmatprep.subr.mxu0 0.0
  %672 = vmatpush1.msra.mxu0 0.0
  %673 = vmatprep.subr.mxu0 0.0
  %674 = vmatpush1.msra.mxu0 0.0
  %675 = vmatprep.subr.mxu0 0.0
  %676 = vmatpush1.msra.mxu0 0.0
  %677 = vmatprep.subr.mxu0 0.0
  %678 = vmatpush1.msra.mxu0 0.0
  %679 = vmatprep.subr.mxu0 0.0
  %680 = vmatpush1.msra.mxu0 0.0
  %681 = vmatprep.subr.mxu0 0.0
  %682 = vmatpush1.msra.mxu0 0.0
  %683 = vmatprep.subr.mxu0 0.0
  %684 = vmatpush1.msra.mxu0 0.0
  %685 = vmatprep.subr.mxu0 0.0
  %686 = vmatpush1.msra.mxu0 0.0
  %687 = vmatprep.subr.mxu0 0.0
  %688 = vmatpush1.msra.mxu0 0.0
  %689 = vmatprep.subr.mxu0 0.0
  %690 = vmatpush1.msra.mxu0 0.0
  %691 = vmatprep.mubr.f32.mxu0 0.0
  %692 = vmatmul.mubr.f32.gmra.mrb[0].mxu0 %v554
  %v693 = vpop.f32.mrb[0].mxu0
  %v694 = vadd.f32 %v550, %v693
  %v695 = vpop.f32.mrb[0].mxu0
  %v696 = vadd.f32 %v550, %v695
  %697 = vdwg.mxu0
  %v698 = vxor.u32 %v623, 2147483648
  %v699 = vxor.u32 %v625, 2147483648
  %v700 = vxor.u32 %v694, 2147483648
  %v701 = vxor.u32 %v696, 2147483648
  %v702 = vmul.f32 %v698, 1.442695
  %v703 = vpow.pop %v702
  %v704 = vmul.f32 %v699, 1.442695
  %v705 = vpow.pop %v704
  %v706 = vmul.f32 %v700, 1.442695
  %v707 = vpow.pop %v706
  %v708 = vmul.f32 %v701, 1.442695
  %v709 = vpow.pop %v708
  %v710 = vadd.f32 %v703, 1.0
  %v711 = vadd.f32 %v705, 1.0
  %v712 = vadd.f32 %v707, 1.0
  %v713 = vadd.f32 %v709, 1.0
  %v714 = vrcp.pop %v710
  %v715 = vmul.f32 1.0, %v714
  %v716 = vrcp.pop %v711
  %v717 = vmul.f32 1.0, %v716
  %v718 = vrcp.pop %v712
  %v719 = vmul.f32 1.0, %v718
  %v720 = vrcp.pop %v713
  %v721 = vmul.f32 1.0, %v720
  %v726 = vcombine.low %v715, %v717
  %v727 = vcombine.low %v719, %v721
  %730 = vst [vmem:[%s5] sm:$0x77] %v726
  %731 = vst [vmem:[%s5 + $0x8] sm:$0x77] %v727
  // Predicated region
  $region22: #{_reflection_field_impl.1} parent=0 // pred_check
    _
  $region23: #{_reflection_field_impl.1} parent=0 // pred_check_branch
    %733 = sbr.rel (0) target = $region25
  $region24: #{_reflection_field_impl.1} parent=0 // pred_region
    _
  $region25: #{_reflection_field_impl.1} parent=0 // pred_fallthru
    _
  // Predicated region
  $region26: #{_reflection_field_impl.1} parent=0 // pred_check
    _
  $region27: #{_reflection_field_impl.1} parent=0 // pred_check_branch
    %735 = sbr.rel (0) target = $region29
  $region28: #{_reflection_field_impl.1} parent=0 // pred_region
    _
  $region29: #{_reflection_field_impl.1} parent=0 // pred_fallthru
    _

</llo_original>
